<compile_context>
chip_gen: v5e
topology: v5e:2x2
jax: 0.10.0
libtpu: 0.0.40
codegen_flags: <defaults>
</compile_context>

<pallas_src>
import functools

import jax
import jax.numpy as jnp
from jax.experimental import pallas as pl
from jax.experimental.pallas import tpu as pltpu


def _chamfer_kernel(x_ref, yt_ref, xx_ref, yy_ref, o_ref,
                    rowmin_ref, colmin_ref, acc_ref, *,
                    n_points, m_points, tn, tm):
    ni = pl.program_id(1)            # N-tile index (outer spatial axis)
    mj = pl.program_id(2)            # M-tile index (inner spatial axis)
    n_nt = pl.num_programs(1)
    n_mt = pl.num_programs(2)

    # Fresh per-batch loss accumulator.
    @pl.when((ni == 0) & (mj == 0))
    def _():
        acc_ref[...] = jnp.zeros_like(acc_ref)

    x = x_ref[0].astype(jnp.float32)      # (TN, D)  gts tile
    yt = yt_ref[0].astype(jnp.float32)    # (D, TM)  preds tile (pre-transposed)
    xx = xx_ref[0]                        # (TN, 1)  ||x||^2 (f32, +inf in padding)
    yy = yy_ref[0]                        # (1, TM)  ||y||^2 (f32, +inf in padding)

    d = x.shape[-1]
    if d <= 8:
        # Small coordinate dim: VPU broadcast-FMAs, no padded-K MXU pass.
        zz = x[:, 0:1] * yt[0:1, :]
        for k in range(1, d):
            zz = zz + x[:, k:k + 1] * yt[k:k + 1, :]
    else:
        zz = jnp.dot(x, yt, preferred_element_type=jnp.float32)

    p = xx + yy - 2.0 * zz                # (TN, TM) pairwise squared distances

    r = jnp.min(p, axis=1, keepdims=True)   # (TN, 1): min over this M tile
    c = jnp.min(p, axis=0, keepdims=True)   # (1, TM): min over this N tile

    # Running min over preds (inner M axis) for the current N tile.
    @pl.when(mj == 0)
    def _():
        rowmin_ref[...] = r

    @pl.when(mj != 0)
    def _():
        rowmin_ref[...] = jnp.minimum(rowmin_ref[...], r)

    # Running min over gts (outer N axis); one scratch slot per M tile.
    @pl.when(ni == 0)
    def _():
        colmin_ref[mj] = c

    @pl.when(ni != 0)
    def _():
        colmin_ref[mj] = jnp.minimum(colmin_ref[mj], c)

    # loss_2 contribution: sum_i min_j P for this N tile, after all M tiles.
    @pl.when(mj == n_mt - 1)
    def _():
        row_ids = ni * tn + jax.lax.broadcasted_iota(jnp.int32, (tn, 1), 0)
        rm = jnp.where(row_ids < n_points, rowmin_ref[...], 0.0)
        acc_ref[...] += jnp.sum(rm, axis=0, keepdims=True)

    # loss_1 contribution: sum_j min_i P for this M tile, after all N tiles.
    @pl.when(ni == n_nt - 1)
    def _():
        col_ids = mj * tm + jax.lax.broadcasted_iota(jnp.int32, (1, tm), 1)
        cm = jnp.where(col_ids < m_points, colmin_ref[mj], 0.0)
        acc_ref[...] += jnp.sum(cm, axis=1, keepdims=True)

    # Single store of the per-batch loss on the very last inner step.
    @pl.when((ni == n_nt - 1) & (mj == n_mt - 1))
    def _():
        o_ref[0] = acc_ref[...]


def _ceil_to(x: int, m: int) -> int:
    return ((x + m - 1) // m) * m


def chamfer_loss(gts: jax.Array, preds: jax.Array,
                 *, tile_n: int = 256, tile_m: int = 256) -> jax.Array:
    """gts: (B, N, D), preds: (B, M, D) -> scalar float32 Chamfer loss."""
    B, N, D = gts.shape
    B2, M, D2 = preds.shape
    assert B == B2 and D == D2

    tn = min(tile_n, _ceil_to(N, 8))       # sublane-aligned N tile
    tm = min(tile_m, _ceil_to(M, 128))     # lane-aligned M tile
    n_pad = _ceil_to(N, tn)
    m_pad = _ceil_to(M, tm)
    n_nt = n_pad // tn
    n_mt = m_pad // tm

    # Squared norms, computed once in f32 in the wrapper (cheap mem-bound XLA
    # op).  Padded points get +inf so they can never win a min in the kernel.
    xx = jnp.sum(gts.astype(jnp.float32) ** 2, axis=-1, keepdims=True)    # (B, N, 1)
    yy = jnp.sum(preds.astype(jnp.float32) ** 2, axis=-1)[:, None, :]     # (B, 1, M)
    xx = jnp.pad(xx, ((0, 0), (0, n_pad - N), (0, 0)), constant_values=jnp.inf)
    yy = jnp.pad(yy, ((0, 0), (0, 0), (0, m_pad - M)), constant_values=jnp.inf)

    # Coordinates stay in their input dtype (e.g. bf16) in HBM; preds is
    # pre-transposed so its points sit on the lane axis inside the kernel.
    gts_p = jnp.pad(gts, ((0, 0), (0, n_pad - N), (0, 0)))
    preds_t = jnp.pad(jnp.transpose(preds, (0, 2, 1)),
                      ((0, 0), (0, 0), (0, m_pad - M)))                    # (B, D, Mp)

    kernel = functools.partial(_chamfer_kernel,
                               n_points=N, m_points=M, tn=tn, tm=tm)

    out = pl.pallas_call(
        kernel,
        out_shape=jax.ShapeDtypeStruct((B, 1, 1), jnp.float32),
        grid_spec=pltpu.PrefetchScalarGridSpec(
            num_scalar_prefetch=0,
            grid=(B, n_nt, n_mt),
            in_specs=[
                pl.BlockSpec((1, tn, D), lambda b, ni, mj: (b, ni, 0)),   # gts
                pl.BlockSpec((1, D, tm), lambda b, ni, mj: (b, 0, mj)),   # preds^T
                pl.BlockSpec((1, tn, 1), lambda b, ni, mj: (b, ni, 0)),   # ||x||^2
                pl.BlockSpec((1, 1, tm), lambda b, ni, mj: (b, 0, mj)),   # ||y||^2
            ],
            out_specs=pl.BlockSpec((1, 1, 1), lambda b, ni, mj: (b, 0, 0)),
            scratch_shapes=[
                pltpu.VMEM((tn, 1), jnp.float32),        # row-min (min over preds)
                pltpu.VMEM((n_mt, 1, tm), jnp.float32),  # col-min (min over gts)
                pltpu.VMEM((1, 1), jnp.float32),         # per-batch loss accumulator
            ],
        ),
        compiler_params=pltpu.CompilerParams(
            dimension_semantics=("parallel", "arbitrary", "arbitrary"),
            vmem_limit_bytes=32 * 1024 * 1024,
        ),
    )(gts_p, preds_t, xx, yy)

    return jnp.sum(out)   # sum per-batch partial losses


def chamfer_loss_ref(gts, preds):
    # Pure-JAX reference mirroring the PyTorch forward.
    gts = gts.astype(jnp.float32)
    preds = preds.astype(jnp.float32)
    xx = jnp.sum(gts * gts, axis=-1)           # (B, N)
    yy = jnp.sum(preds * preds, axis=-1)       # (B, M)
    zz = jnp.einsum("bnd,bmd->bnm", gts, preds)
    P = xx[:, :, None] + yy[:, None, :] - 2.0 * zz
    return jnp.sum(jnp.min(P, axis=1)) + jnp.sum(jnp.min(P, axis=2))


if __name__ == "__main__":
    key = jax.random.PRNGKey(0)
    k1, k2, k3, k4 = jax.random.split(key, 4)

    loss_fn = jax.jit(functools.partial(chamfer_loss, tile_n=128, tile_m=128))

    # Case 1: typical point cloud (D=3 -> VPU cross-term path), non-tile-
    # aligned N/M to exercise +inf padding / iota masking, multi-tile on both
    # spatial axes, batch of 2.
    B, N, M, D = 2, 200, 160, 3
    gts = jax.random.normal(k1, (B, N, D), dtype=jnp.float32)
    preds = jax.random.normal(k2, (B, M, D), dtype=jnp.float32)
    loss = jax.block_until_ready(loss_fn(gts, preds))
    ref = jax.block_until_ready(chamfer_loss_ref(gts, preds))
    assert jnp.allclose(loss, ref, rtol=1e-4, atol=1e-4), (loss, ref)

    # Case 2: larger feature dim (D=16 -> MXU cross-term path), tile-aligned.
    B, N, M, D = 1, 128, 256, 16
    gts = jax.random.normal(k3, (B, N, D), dtype=jnp.float32)
    preds = jax.random.normal(k4, (B, M, D), dtype=jnp.float32)
    loss = jax.block_until_ready(loss_fn(gts, preds))
    ref = jax.block_until_ready(chamfer_loss_ref(gts, preds))
    assert jnp.allclose(loss, ref, rtol=1e-4, atol=1e-4), (loss, ref)

    print("KERNEL_OK")
</pallas_src>

<mosaic_0001>
module attributes {stable_mosaic.version = 11 : i64} {
  func.func @_chamfer_kernel(%arg0: i32, %arg1: i32, %arg2: i32, %arg3: memref<1x128x3xf32, #tpu.memory_space<vmem>>, %arg4: memref<1x3x128xf32, #tpu.memory_space<vmem>>, %arg5: memref<1x128x1xf32, #tpu.memory_space<vmem>>, %arg6: memref<1x1x128xf32, #tpu.memory_space<vmem>>, %arg7: memref<1x1x1xf32, #tpu.memory_space<vmem>>, %arg8: memref<128x1xf32, #tpu.memory_space<vmem>>, %arg9: memref<2x1x128xf32, #tpu.memory_space<vmem>>, %arg10: memref<1x1xf32, #tpu.memory_space<vmem>>) attributes {dimension_semantics = [#tpu.dimension_semantics<parallel>, #tpu.dimension_semantics<arbitrary>, #tpu.dimension_semantics<arbitrary>], iteration_bounds = array<i64: 2, 2, 2>, scalar_prefetch = 0 : i64, scratch_operands = 3 : i64, tpu.core_type = #tpu.core_type<tc>, window_params = [{transform_indices = @transform_0, window_bounds = array<i64: 1, 128, 3>}, {transform_indices = @transform_1, window_bounds = array<i64: 1, 3, 128>}, {transform_indices = @transform_2, window_bounds = array<i64: 1, 128, 1>}, {transform_indices = @transform_3, window_bounds = array<i64: 1, 1, 128>}, {transform_indices = @transform_4, window_bounds = array<i64: 1, 1, 1>}]} {
    %c0_i32 = arith.constant 0 : i32
    %0 = arith.cmpi eq, %arg1, %c0_i32 : i32
    %c0_i32_0 = arith.constant 0 : i32
    %1 = arith.cmpi eq, %arg2, %c0_i32_0 : i32
    %2 = arith.andi %0, %1 : i1
    %3 = arith.extui %2 : i1 to i32
    %c0_i32_1 = arith.constant 0 : i32
    %4 = arith.cmpi ne, %3, %c0_i32_1 : i32
    scf.if %4 {
      %cst_29 = arith.constant 0.000000e+00 : f32
      %63 = vector.broadcast %cst_29 : f32 to vector<1x1xf32>
      %c0_30 = arith.constant 0 : index
      %c0_31 = arith.constant 0 : index
      %64 = vector.load %arg10[%c0_30, %c0_31] : memref<1x1xf32, #tpu.memory_space<vmem>>, vector<1x1xf32>
      tpu.vector_store %arg10[%c0_30, %c0_31], %63 {strides = array<i32>} : memref<1x1xf32, #tpu.memory_space<vmem>>, vector<1x1xf32>,
    } else {
    }
    %c0 = arith.constant 0 : index
    %c0_2 = arith.constant 0 : index
    %c0_3 = arith.constant 0 : index
    %5 = vector.load %arg3[%c0, %c0_2, %c0_3] : memref<1x128x3xf32, #tpu.memory_space<vmem>>, vector<1x128x3xf32>
    %6 = vector.shape_cast %5 : vector<1x128x3xf32> to vector<128x3xf32>
    %c0_4 = arith.constant 0 : index
    %c0_5 = arith.constant 0 : index
    %c0_6 = arith.constant 0 : index
    %7 = vector.load %arg4[%c0_4, %c0_5, %c0_6] : memref<1x3x128xf32, #tpu.memory_space<vmem>>, vector<1x3x128xf32>
    %8 = vector.shape_cast %7 : vector<1x3x128xf32> to vector<3x128xf32>
    %c0_7 = arith.constant 0 : index
    %c0_8 = arith.constant 0 : index
    %c0_9 = arith.constant 0 : index
    %9 = vector.load %arg5[%c0_7, %c0_8, %c0_9] : memref<1x128x1xf32, #tpu.memory_space<vmem>>, vector<1x128x1xf32>
    %10 = vector.shape_cast %9 : vector<1x128x1xf32> to vector<128x1xf32>
    %c0_10 = arith.constant 0 : index
    %c0_11 = arith.constant 0 : index
    %c0_12 = arith.constant 0 : index
    %11 = vector.load %arg6[%c0_10, %c0_11, %c0_12] : memref<1x1x128xf32, #tpu.memory_space<vmem>>, vector<1x1x128xf32>
    %12 = vector.shape_cast %11 : vector<1x1x128xf32> to vector<1x128xf32>
    %13 = vector.extract_strided_slice %6 {offsets = [0, 0], sizes = [128, 1], strides = [1, 1]} : vector<128x3xf32> to vector<128x1xf32>
    %14 = vector.extract_strided_slice %8 {offsets = [0, 0], sizes = [1, 128], strides = [1, 1]} : vector<3x128xf32> to vector<1x128xf32>
    %15 = vector.broadcast %13 : vector<128x1xf32> to vector<128x128xf32>
    %16 = vector.broadcast %14 : vector<1x128xf32> to vector<128x128xf32>
    %17 = arith.mulf %15, %16 : vector<128x128xf32>
    %18 = vector.extract_strided_slice %6 {offsets = [0, 1], sizes = [128, 1], strides = [1, 1]} : vector<128x3xf32> to vector<128x1xf32>
    %19 = vector.extract_strided_slice %8 {offsets = [1, 0], sizes = [1, 128], strides = [1, 1]} : vector<3x128xf32> to vector<1x128xf32>
    %20 = vector.broadcast %18 : vector<128x1xf32> to vector<128x128xf32>
    %21 = vector.broadcast %19 : vector<1x128xf32> to vector<128x128xf32>
    %22 = arith.mulf %20, %21 : vector<128x128xf32>
    %23 = arith.addf %17, %22 : vector<128x128xf32>
    %24 = vector.extract_strided_slice %6 {offsets = [0, 2], sizes = [128, 1], strides = [1, 1]} : vector<128x3xf32> to vector<128x1xf32>
    %25 = vector.extract_strided_slice %8 {offsets = [2, 0], sizes = [1, 128], strides = [1, 1]} : vector<3x128xf32> to vector<1x128xf32>
    %26 = vector.broadcast %24 : vector<128x1xf32> to vector<128x128xf32>
    %27 = vector.broadcast %25 : vector<1x128xf32> to vector<128x128xf32>
    %28 = arith.mulf %26, %27 : vector<128x128xf32>
    %29 = arith.addf %23, %28 : vector<128x128xf32>
    %30 = vector.broadcast %10 : vector<128x1xf32> to vector<128x128xf32>
    %31 = vector.broadcast %12 : vector<1x128xf32> to vector<128x128xf32>
    %32 = arith.addf %30, %31 : vector<128x128xf32>
    %cst = arith.constant 2.000000e+00 : f32
    %33 = vector.broadcast %cst : f32 to vector<128x128xf32>
    %34 = arith.mulf %33, %29 : vector<128x128xf32>
    %35 = arith.subf %32, %34 : vector<128x128xf32>
    %cst_13 = arith.constant dense<0x7F800000> : vector<128xf32>
    %36 = vector.multi_reduction <minimumf>, %35, %cst_13 [1] : vector<128x128xf32> to vector<128xf32>
    %37 = vector.shape_cast %36 : vector<128xf32> to vector<128x1xf32>
    %cst_14 = arith.constant dense<0x7F800000> : vector<128xf32>
    %38 = vector.multi_reduction <minimumf>, %35, %cst_14 [0] : vector<128x128xf32> to vector<128xf32>
    %39 = vector.shape_cast %38 : vector<128xf32> to vector<1x128xf32>
    %c0_i32_15 = arith.constant 0 : i32
    %40 = arith.cmpi eq, %arg2, %c0_i32_15 : i32
    %41 = arith.extui %40 : i1 to i32
    %c0_i32_16 = arith.constant 0 : i32
    %42 = arith.cmpi ne, %41, %c0_i32_16 : i32
    scf.if %42 {
      %c0_29 = arith.constant 0 : index
      %c0_30 = arith.constant 0 : index
      %63 = vector.load %arg8[%c0_29, %c0_30] : memref<128x1xf32, #tpu.memory_space<vmem>>, vector<128x1xf32>
      tpu.vector_store %arg8[%c0_29, %c0_30], %37 {strides = array<i32>} : memref<128x1xf32, #tpu.memory_space<vmem>>, vector<128x1xf32>,
    } else {
    }
    %c0_i32_17 = arith.constant 0 : i32
    %43 = arith.cmpi ne, %arg2, %c0_i32_17 : i32
    %44 = arith.extui %43 : i1 to i32
    %c0_i32_18 = arith.constant 0 : i32
    %45 = arith.cmpi ne, %44, %c0_i32_18 : i32
    scf.if %45 {
      %c0_29 = arith.constant 0 : index
      %c0_30 = arith.constant 0 : index
      %63 = vector.load %arg8[%c0_29, %c0_30] : memref<128x1xf32, #tpu.memory_space<vmem>>, vector<128x1xf32>
      %64 = arith.minimumf %63, %37 : vector<128x1xf32>
      %c0_31 = arith.constant 0 : index
      %c0_32 = arith.constant 0 : index
      %65 = vector.load %arg8[%c0_31, %c0_32] : memref<128x1xf32, #tpu.memory_space<vmem>>, vector<128x1xf32>
      tpu.vector_store %arg8[%c0_31, %c0_32], %64 {strides = array<i32>} : memref<128x1xf32, #tpu.memory_space<vmem>>, vector<128x1xf32>,
    } else {
    }
    %c0_i32_19 = arith.constant 0 : i32
    %46 = arith.cmpi eq, %arg1, %c0_i32_19 : i32
    %47 = arith.extui %46 : i1 to i32
    %c0_i32_20 = arith.constant 0 : i32
    %48 = arith.cmpi ne, %47, %c0_i32_20 : i32
    scf.if %48 {
      %63 = arith.index_cast %arg2 : i32 to index
      %c0_29 = arith.constant 0 : index
      %c0_30 = arith.constant 0 : index
      %64 = vector.load %arg9[%63, %c0_29, %c0_30] : memref<2x1x128xf32, #tpu.memory_space<vmem>>, vector<1x1x128xf32>
      %65 = vector.shape_cast %64 : vector<1x1x128xf32> to vector<1x128xf32>
      %66 = vector.shape_cast %39 : vector<1x128xf32> to vector<1x1x128xf32>
      tpu.vector_store %arg9[%63, %c0_29, %c0_30], %66 {strides = array<i32>} : memref<2x1x128xf32, #tpu.memory_space<vmem>>, vector<1x1x128xf32>,
    } else {
    }
    %c0_i32_21 = arith.constant 0 : i32
    %49 = arith.cmpi ne, %arg1, %c0_i32_21 : i32
    %50 = arith.extui %49 : i1 to i32
    %c0_i32_22 = arith.constant 0 : i32
    %51 = arith.cmpi ne, %50, %c0_i32_22 : i32
    scf.if %51 {
      %63 = arith.index_cast %arg2 : i32 to index
      %c0_29 = arith.constant 0 : index
      %c0_30 = arith.constant 0 : index
      %64 = vector.load %arg9[%63, %c0_29, %c0_30] : memref<2x1x128xf32, #tpu.memory_space<vmem>>, vector<1x1x128xf32>
      %65 = vector.shape_cast %64 : vector<1x1x128xf32> to vector<1x128xf32>
      %66 = arith.minimumf %65, %39 : vector<1x128xf32>
      %67 = arith.index_cast %arg2 : i32 to index
      %c0_31 = arith.constant 0 : index
      %c0_32 = arith.constant 0 : index
      %68 = vector.load %arg9[%67, %c0_31, %c0_32] : memref<2x1x128xf32, #tpu.memory_space<vmem>>, vector<1x1x128xf32>
      %69 = vector.shape_cast %68 : vector<1x1x128xf32> to vector<1x128xf32>
      %70 = vector.shape_cast %66 : vector<1x128xf32> to vector<1x1x128xf32>
      tpu.vector_store %arg9[%67, %c0_31, %c0_32], %70 {strides = array<i32>} : memref<2x1x128xf32, #tpu.memory_space<vmem>>, vector<1x1x128xf32>,
    } else {
    }
    %c1_i32 = arith.constant 1 : i32
    %52 = arith.cmpi eq, %arg2, %c1_i32 : i32
    %53 = arith.extui %52 : i1 to i32
    %c0_i32_23 = arith.constant 0 : i32
    %54 = arith.cmpi ne, %53, %c0_i32_23 : i32
    scf.if %54 {
      %c128_i32 = arith.constant 128 : i32
      %63 = arith.muli %arg1, %c128_i32 : i32
      %64 = tpu.iota {dimensions = array<i32: 0>} : vector<128x1xi32>
      %65 = vector.broadcast %63 : i32 to vector<128x1xi32>
      %66 = arith.addi %65, %64 : vector<128x1xi32>
      %c200_i32 = arith.constant 200 : i32
      %67 = vector.broadcast %c200_i32 : i32 to vector<128x1xi32>
      %68 = arith.cmpi slt, %66, %67 : vector<128x1xi32>
      %c0_29 = arith.constant 0 : index
      %c0_30 = arith.constant 0 : index
      %69 = vector.load %arg8[%c0_29, %c0_30] : memref<128x1xf32, #tpu.memory_space<vmem>>, vector<128x1xf32>
      %cst_31 = arith.constant 0.000000e+00 : f32
      %70 = vector.broadcast %cst_31 : f32 to vector<128x1xf32>
      %71 = arith.select %68, %69, %70 : vector<128x1xi1>, vector<128x1xf32>
      %c0_32 = arith.constant 0 : index
      %c0_33 = arith.constant 0 : index
      %72 = vector.load %arg10[%c0_32, %c0_33] : memref<1x1xf32, #tpu.memory_space<vmem>>, vector<1x1xf32>
      %cst_34 = arith.constant dense<0.000000e+00> : vector<1xf32>
      %73 = vector.multi_reduction <add>, %71, %cst_34 [0] : vector<128x1xf32> to vector<1xf32>
      %74 = vector.shape_cast %73 : vector<1xf32> to vector<1x1xf32>
      %75 = arith.addf %72, %74 : vector<1x1xf32>
      %c0_35 = arith.constant 0 : index
      %c0_36 = arith.constant 0 : index
      %76 = vector.load %arg10[%c0_35, %c0_36] : memref<1x1xf32, #tpu.memory_space<vmem>>, vector<1x1xf32>
      tpu.vector_store %arg10[%c0_35, %c0_36], %75 {strides = array<i32>} : memref<1x1xf32, #tpu.memory_space<vmem>>, vector<1x1xf32>,
    } else {
    }
    %c1_i32_24 = arith.constant 1 : i32
    %55 = arith.cmpi eq, %arg1, %c1_i32_24 : i32
    %56 = arith.extui %55 : i1 to i32
    %c0_i32_25 = arith.constant 0 : i32
    %57 = arith.cmpi ne, %56, %c0_i32_25 : i32
    scf.if %57 {
      %c128_i32 = arith.constant 128 : i32
      %63 = arith.muli %arg2, %c128_i32 : i32
      %64 = tpu.iota {dimensions = array<i32: 1>} : vector<1x128xi32>
      %65 = vector.broadcast %63 : i32 to vector<1x128xi32>
      %66 = arith.addi %65, %64 : vector<1x128xi32>
      %c160_i32 = arith.constant 160 : i32
      %67 = vector.broadcast %c160_i32 : i32 to vector<1x128xi32>
      %68 = arith.cmpi slt, %66, %67 : vector<1x128xi32>
      %69 = arith.index_cast %arg2 : i32 to index
      %c0_29 = arith.constant 0 : index
      %c0_30 = arith.constant 0 : index
      %70 = vector.load %arg9[%69, %c0_29, %c0_30] : memref<2x1x128xf32, #tpu.memory_space<vmem>>, vector<1x1x128xf32>
      %71 = vector.shape_cast %70 : vector<1x1x128xf32> to vector<1x128xf32>
      %cst_31 = arith.constant 0.000000e+00 : f32
      %72 = vector.broadcast %cst_31 : f32 to vector<1x128xf32>
      %73 = arith.select %68, %71, %72 : vector<1x128xi1>, vector<1x128xf32>
      %c0_32 = arith.constant 0 : index
      %c0_33 = arith.constant 0 : index
      %74 = vector.load %arg10[%c0_32, %c0_33] : memref<1x1xf32, #tpu.memory_space<vmem>>, vector<1x1xf32>
      %cst_34 = arith.constant dense<0.000000e+00> : vector<1xf32>
      %75 = vector.multi_reduction <add>, %73, %cst_34 [1] : vector<1x128xf32> to vector<1xf32>
      %76 = vector.shape_cast %75 : vector<1xf32> to vector<1x1xf32>
      %77 = arith.addf %74, %76 : vector<1x1xf32>
      %c0_35 = arith.constant 0 : index
      %c0_36 = arith.constant 0 : index
      %78 = vector.load %arg10[%c0_35, %c0_36] : memref<1x1xf32, #tpu.memory_space<vmem>>, vector<1x1xf32>
      tpu.vector_store %arg10[%c0_35, %c0_36], %77 {strides = array<i32>} : memref<1x1xf32, #tpu.memory_space<vmem>>, vector<1x1xf32>,
    } else {
    }
    %c1_i32_26 = arith.constant 1 : i32
    %58 = arith.cmpi eq, %arg1, %c1_i32_26 : i32
    %c1_i32_27 = arith.constant 1 : i32
    %59 = arith.cmpi eq, %arg2, %c1_i32_27 : i32
    %60 = arith.andi %58, %59 : i1
    %61 = arith.extui %60 : i1 to i32
    %c0_i32_28 = arith.constant 0 : i32
    %62 = arith.cmpi ne, %61, %c0_i32_28 : i32
    scf.if %62 {
      %c0_29 = arith.constant 0 : index
      %c0_30 = arith.constant 0 : index
      %63 = vector.load %arg10[%c0_29, %c0_30] : memref<1x1xf32, #tpu.memory_space<vmem>>, vector<1x1xf32>
      %c0_31 = arith.constant 0 : index
      %c0_32 = arith.constant 0 : index
      %c0_33 = arith.constant 0 : index
      %64 = vector.load %arg7[%c0_31, %c0_32, %c0_33] : memref<1x1x1xf32, #tpu.memory_space<vmem>>, vector<1x1x1xf32>
      %65 = vector.shape_cast %64 : vector<1x1x1xf32> to vector<1x1xf32>
      %66 = vector.shape_cast %63 : vector<1x1xf32> to vector<1x1x1xf32>
      tpu.vector_store %arg7[%c0_31, %c0_32, %c0_33], %66 {strides = array<i32>} : memref<1x1x1xf32, #tpu.memory_space<vmem>>, vector<1x1x1xf32>,
    } else {
    }
    return
  }
  func.func @transform_0(%arg0: i32, %arg1: i32, %arg2: i32) -> (i32, i32, i32) {
    %c0_i32 = arith.constant 0 : i32
    %c0_i32_0 = arith.constant 0 : i32
    return %arg0, %arg1, %c0_i32 : i32, i32, i32
  }
  func.func @transform_1(%arg0: i32, %arg1: i32, %arg2: i32) -> (i32, i32, i32) {
    %c0_i32 = arith.constant 0 : i32
    %c0_i32_0 = arith.constant 0 : i32
    return %arg0, %c0_i32, %arg2 : i32, i32, i32
  }
  func.func @transform_2(%arg0: i32, %arg1: i32, %arg2: i32) -> (i32, i32, i32) {
    %c0_i32 = arith.constant 0 : i32
    %c0_i32_0 = arith.constant 0 : i32
    return %arg0, %arg1, %c0_i32 : i32, i32, i32
  }
  func.func @transform_3(%arg0: i32, %arg1: i32, %arg2: i32) -> (i32, i32, i32) {
    %c0_i32 = arith.constant 0 : i32
    %c0_i32_0 = arith.constant 0 : i32
    return %arg0, %c0_i32, %arg2 : i32, i32, i32
  }
  func.func @transform_4(%arg0: i32, %arg1: i32, %arg2: i32) -> (i32, i32, i32) {
    %c0_i32 = arith.constant 0 : i32
    %c0_i32_0 = arith.constant 0 : i32
    %c0_i32_1 = arith.constant 0 : i32
    return %arg0, %c0_i32, %c0_i32_0 : i32, i32, i32
  }
}

</mosaic_0001>

<llo_original>
// kernel: chamfer_loss.1
$region0: #{chamfer_loss.1}
  #allocation0 [shape = 'u32[]', space=smem, size = 0x4, offset = 0x4, fixed_abs, tag = 'smem constant byte address 0x4 - core index']
  #allocation1 [shape = 'u32[72,128]{1,0:T(1,128)}', space=vmem, size = 0x9000, scoped, tag = 'internal scratch']
  #allocation2 [shape = 'f32[128,1]{1,0:T(8,128)}', space=vmem, size = 0x10000, scoped, tag = 'scratch operand']
  #allocation3 [shape = 'f32[2,1,128]{2,1,0:T(1,128)}', space=vmem, size = 0x400, scoped, tag = 'scratch operand']
  #allocation4 [shape = 'f32[1,1]{1,0:T(1,128)}', space=vmem, size = 0x200, scoped, tag = 'scratch operand']
  %s0 = inlined_call_operand.vmem [shape: f32[2,256,3], index: 0, kind: input, shape index: {}]
  %s1 = inlined_call_operand.vmem [shape: f32[2,3,256], index: 1, kind: input, shape index: {}]
  %s2 = inlined_call_operand.vmem [shape: f32[2,256,1], index: 2, kind: input, shape index: {}]
  %s3 = inlined_call_operand.vmem [shape: f32[2,1,256], index: 3, kind: input, shape index: {}]
  %s4 = inlined_call_operand.vmem [shape: f32[2,1,1], index: 4, kind: output, shape index: {}]
  %s5 = sld [smem:[#allocation0]]
  $region81: #{chamfer_loss.1} parent=0
    _
  %s7 = ssub.s32 1, %s5
  %s8 = scalar_select 0, %s7, %s5
  loop: start=0, step=1, limit=10
  $region2: #{chamfer_loss.1} parent=0 // loop_pre_header
    _
  $region3: #{chamfer_loss.1} parent=0 // loop_header
    %s10 = sphi 0, %s14
    %p11 = scmp.ge.s32.totalorder %s10, 10
    %s17 = sphi 0, %s36
    %s18 = sphi 0, %s32
    %s19 = sphi 0, %s28
    %s20 = sphi 0, %s17
    %s21 = sphi 0, %s18
    %s22 = sphi 0, %s19
    %s23 = sphi 0, %s20
    %s24 = sphi 0, %s21
    %s25 = sphi 0, %s22
    %s41 = sphi 0, %s43
    %s44 = sphi 0, %s41
    %s45 = sphi 0, %s44
    %s61 = sphi 0, %s45
    %s69 = sphi 0, %s71
    %s72 = sphi 0, %s69
    %s73 = sphi 0, %s72
    %s89 = sphi 0, %s73
    %s97 = sphi 0, %s99
    %s100 = sphi 0, %s97
    %s101 = sphi 0, %s100
    %s117 = sphi 0, %s101
    %s125 = sphi 0, %s127
    %s128 = sphi 0, %s125
    %s129 = sphi 0, %s128
    %s145 = sphi 0, %s129
    %s151 = sphi 0, %s153
    %s154 = sphi 0, %s151
    %s155 = sphi 0, %s154
    %s171 = sphi 0, %s155
  $region4: #{chamfer_loss.1} parent=0 // loop_header_branch
    %13 = sbr.rel (%p11) target = $region8
  $region5: #{chamfer_loss.1} parent=0 // loop_body
    %s15 = ssub.s32 %s10, 1
    %s16 = ssub.s32 %s10, 2
    %s26 = sadd.s32 1, %s19
    %p27 = scmp.ge.s32.totalorder %s26, 2
    %s28 = scalar_select %p27, 0, %s26
    %s29 = sadd.s32 1, %s18
    %s30 = scalar_select %p27, %s29, %s18
    %p31 = scmp.ge.s32.totalorder %s30, 2
    %s32 = scalar_select %p31, 0, %s30
    %s33 = sadd.s32 1, %s17
    %s34 = scalar_select %p31, %s33, %s17
    %p35 = scmp.ge.s32.totalorder %s34, 2
    %s36 = scalar_select %p35, 0, %s34
    %s37 = ssub.s32 %s17, %s36
    %s38 = ssub.s32 %s18, %s32
    %s39 = sor.u32 %s37, %s38
    %p40 = scmp.eq.s32.totalorder %s39, 0
    %s42 = sadd.s32 %s41, 1
    %s43 = scalar_select %p40, %s41, %s42
    %p46 = pneg %p40
    %p47 = scmp.eq.s32.totalorder %s10, 7
    %p48 = por %p46, %p47
    %p49 = scmp.ne.s32.totalorder %s41, %s44
    %p50 = scmp.eq.s32.totalorder %s10, 0
    %p51 = por %p49, %p50
    %p52 = scmp.ne.s32.totalorder %s41, %s44
    %p53 = scmp.eq.s32.totalorder %s15, 7
    %p54 = por %p52, %p53
    %p55 = scmp.ne.s32.totalorder %s44, %s45
    %p56 = scmp.eq.s32.totalorder %s15, 0
    %p57 = por %p55, %p56
    %p58 = scmp.ne.s32.totalorder %s44, %s45
    %p59 = scmp.eq.s32.totalorder %s16, 7
    %p60 = por %p58, %p59
    %p62 = scmp.ne.s32.totalorder %s45, %s61
    %p63 = scmp.eq.s32.totalorder %s16, 0
    %p64 = por %p62, %p63
    %s65 = ssub.s32 %s17, %s36
    %s66 = ssub.s32 %s19, %s28
    %s67 = sor.u32 %s65, %s66
    %p68 = scmp.eq.s32.totalorder %s67, 0
    %s70 = sadd.s32 %s69, 1
    %s71 = scalar_select %p68, %s69, %s70
    %p74 = pneg %p68
    %p75 = scmp.eq.s32.totalorder %s10, 7
    %p76 = por %p74, %p75
    %p77 = scmp.ne.s32.totalorder %s69, %s72
    %p78 = scmp.eq.s32.totalorder %s10, 0
    %p79 = por %p77, %p78
    %p80 = scmp.ne.s32.totalorder %s69, %s72
    %p81 = scmp.eq.s32.totalorder %s15, 7
    %p82 = por %p80, %p81
    %p83 = scmp.ne.s32.totalorder %s72, %s73
    %p84 = scmp.eq.s32.totalorder %s15, 0
    %p85 = por %p83, %p84
    %p86 = scmp.ne.s32.totalorder %s72, %s73
    %p87 = scmp.eq.s32.totalorder %s16, 7
    %p88 = por %p86, %p87
    %p90 = scmp.ne.s32.totalorder %s73, %s89
    %p91 = scmp.eq.s32.totalorder %s16, 0
    %p92 = por %p90, %p91
    %s93 = ssub.s32 %s17, %s36
    %s94 = ssub.s32 %s18, %s32
    %s95 = sor.u32 %s93, %s94
    %p96 = scmp.eq.s32.totalorder %s95, 0
    %s98 = sadd.s32 %s97, 1
    %s99 = scalar_select %p96, %s97, %s98
    %p102 = pneg %p96
    %p103 = scmp.eq.s32.totalorder %s10, 7
    %p104 = por %p102, %p103
    %p105 = scmp.ne.s32.totalorder %s97, %s100
    %p106 = scmp.eq.s32.totalorder %s10, 0
    %p107 = por %p105, %p106
    %p108 = scmp.ne.s32.totalorder %s97, %s100
    %p109 = scmp.eq.s32.totalorder %s15, 7
    %p110 = por %p108, %p109
    %p111 = scmp.ne.s32.totalorder %s100, %s101
    %p112 = scmp.eq.s32.totalorder %s15, 0
    %p113 = por %p111, %p112
    %p114 = scmp.ne.s32.totalorder %s100, %s101
    %p115 = scmp.eq.s32.totalorder %s16, 7
    %p116 = por %p114, %p115
    %p118 = scmp.ne.s32.totalorder %s101, %s117
    %p119 = scmp.eq.s32.totalorder %s16, 0
    %p120 = por %p118, %p119
    %s121 = ssub.s32 %s17, %s36
    %s122 = ssub.s32 %s19, %s28
    %s123 = sor.u32 %s121, %s122
    %p124 = scmp.eq.s32.totalorder %s123, 0
    %s126 = sadd.s32 %s125, 1
    %s127 = scalar_select %p124, %s125, %s126
    %p130 = pneg %p124
    %p131 = scmp.eq.s32.totalorder %s10, 7
    %p132 = por %p130, %p131
    %p133 = scmp.ne.s32.totalorder %s125, %s128
    %p134 = scmp.eq.s32.totalorder %s10, 0
    %p135 = por %p133, %p134
    %p136 = scmp.ne.s32.totalorder %s125, %s128
    %p137 = scmp.eq.s32.totalorder %s15, 7
    %p138 = por %p136, %p137
    %p139 = scmp.ne.s32.totalorder %s128, %s129
    %p140 = scmp.eq.s32.totalorder %s15, 0
    %p141 = por %p139, %p140
    %p142 = scmp.ne.s32.totalorder %s128, %s129
    %p143 = scmp.eq.s32.totalorder %s16, 7
    %p144 = por %p142, %p143
    %p146 = scmp.ne.s32.totalorder %s129, %s145
    %p147 = scmp.eq.s32.totalorder %s16, 0
    %p148 = por %p146, %p147
    %s149 = ssub.s32 %s17, %s36
    %p150 = scmp.eq.s32.totalorder %s149, 0
    %s152 = sadd.s32 %s151, 1
    %s153 = scalar_select %p150, %s151, %s152
    %p156 = pneg %p150
    %p157 = scmp.eq.s32.totalorder %s10, 7
    %p158 = por %p156, %p157
    %p159 = scmp.ne.s32.totalorder %s151, %s154
    %p160 = scmp.eq.s32.totalorder %s10, 0
    %p161 = por %p159, %p160
    %p162 = scmp.ne.s32.totalorder %s151, %s154
    %p163 = scmp.eq.s32.totalorder %s15, 7
    %p164 = por %p162, %p163
    %p165 = scmp.ne.s32.totalorder %s154, %s155
    %p166 = scmp.eq.s32.totalorder %s15, 0
    %p167 = por %p165, %p166
    %p168 = scmp.ne.s32.totalorder %s154, %s155
    %p169 = scmp.eq.s32.totalorder %s16, 7
    %p170 = por %p168, %p169
    %p172 = scmp.ne.s32.totalorder %s155, %s171
    %p173 = scmp.eq.s32.totalorder %s16, 0
    %p174 = por %p172, %p173
    %p175 = scmp.le.s32.totalorder 1, %s10
    %p176 = scmp.lt.s32.totalorder %s10, 9
    %p177 = pnand %p175, %p176
    %p178 = pneg %p177
    // Predicated region
    $region9: #{chamfer_loss.1} parent=5 // pred_check
      _
    $region10: #{chamfer_loss.1} parent=5 // pred_check_branch
      %180 = sbr.rel (%p177) target = $region12
    $region11: #{chamfer_loss.1} parent=5 // pred_region
      %s181 = ssub.s32 %s10, 1
    $region12: #{chamfer_loss.1} parent=5 // pred_fallthru
      _
    %p182 = scmp.lt.s32.totalorder %s10, 8
    // Predicated region
    $region13: #{chamfer_loss.1} parent=5 // pred_check
      %p183 = pneg %p182
    $region14: #{chamfer_loss.1} parent=5 // pred_check_branch
      %185 = sbr.rel (%p183) target = $region16
    $region15: #{chamfer_loss.1} parent=5 // pred_region
      // Predicated region
      $region17: #{chamfer_loss.1} parent=15 // pred_check
        %p186 = pneg %p51
      $region18: #{chamfer_loss.1} parent=15 // pred_check_branch
        %188 = sbr.rel (%p186) target = $region20
      $region19: #{chamfer_loss.1} parent=15 // pred_region
        %s189 = smul.u32 16, %s18
        %p190 = scmp.lt.s32.totalorder %s17, 1
        %s191 = scalar_select %p190, %s17, 1
        %p192 = scmp.lt.s32.totalorder %s189, 31
        %s193 = scalar_select %p192, %s189, 31
        %s194 = smul.addr %s191, 32
        %s195 = sadd.s32 %s193, %s194
        %s196 = smul.addr %s195, 8
        %s197 = scalar_lea.vmem %s0, %s196
        %s198 = smul.u32 16, %s18
      $region20: #{chamfer_loss.1} parent=15 // pred_fallthru
        _
      // Predicated region
      $region21: #{chamfer_loss.1} parent=15 // pred_check
        %p199 = pneg %p79
      $region22: #{chamfer_loss.1} parent=15 // pred_check_branch
        %201 = sbr.rel (%p199) target = $region24
      $region23: #{chamfer_loss.1} parent=15 // pred_region
        %p202 = scmp.lt.s32.totalorder %s17, 1
        %s203 = scalar_select %p202, %s17, 1
        %p204 = scmp.lt.s32.totalorder %s19, 1
        %s205 = scalar_select %p204, %s19, 1
        %s206 = smul.addr %s203, 2
        %s207 = sadd.s32 %s205, %s206
        %s208 = smul.addr %s207, 4
        %s209 = scalar_lea.vmem %s1, %s208
      $region24: #{chamfer_loss.1} parent=15 // pred_fallthru
        _
      // Predicated region
      $region25: #{chamfer_loss.1} parent=15 // pred_check
        %p210 = pneg %p107
      $region26: #{chamfer_loss.1} parent=15 // pred_check_branch
        %212 = sbr.rel (%p210) target = $region28
      $region27: #{chamfer_loss.1} parent=15 // pred_region
        %s213 = smul.u32 16, %s18
        %p214 = scmp.lt.s32.totalorder %s17, 1
        %s215 = scalar_select %p214, %s17, 1
        %p216 = scmp.lt.s32.totalorder %s213, 31
        %s217 = scalar_select %p216, %s213, 31
        %s218 = smul.addr %s215, 32
        %s219 = sadd.s32 %s217, %s218
        %s220 = smul.addr %s219, 8
        %s221 = scalar_lea.vmem %s2, %s220
        %s222 = smul.u32 16, %s18
      $region28: #{chamfer_loss.1} parent=15 // pred_fallthru
        _
      // Predicated region
      $region29: #{chamfer_loss.1} parent=15 // pred_check
        %p223 = pneg %p135
      $region30: #{chamfer_loss.1} parent=15 // pred_check_branch
        %225 = sbr.rel (%p223) target = $region32
      $region31: #{chamfer_loss.1} parent=15 // pred_region
        %p226 = scmp.lt.s32.totalorder %s17, 1
        %s227 = scalar_select %p226, %s17, 1
        %p228 = scmp.lt.s32.totalorder %s19, 1
        %s229 = scalar_select %p228, %s19, 1
        %s230 = smul.addr %s227, 2
        %s231 = sadd.s32 %s229, %s230
        %s232 = scalar_lea.vmem %s3, %s231
      $region32: #{chamfer_loss.1} parent=15 // pred_fallthru
        _
    $region16: #{chamfer_loss.1} parent=5 // pred_fallthru
      _
    %p233 = scmp.le.s32.totalorder 1, %s10
    %p234 = scmp.lt.s32.totalorder %s10, 9
    %p235 = pnand %p233, %p234
    %p236 = pneg %p235
    // Predicated region
    $region33: #{chamfer_loss.1} parent=5 // pred_check
      _
    $region34: #{chamfer_loss.1} parent=5 // pred_check_branch
      %238 = sbr.rel (%p235) target = $region36
    $region35: #{chamfer_loss.1} parent=5 // pred_region
      %s239 = ssub.s32 %s10, 1
      %s240 = smul.u32 16, %s21
      %p241 = scmp.lt.s32.totalorder %s20, 1
      %s242 = scalar_select %p241, %s20, 1
      %p243 = scmp.lt.s32.totalorder %s240, 31
      %s244 = scalar_select %p243, %s240, 31
      %s245 = smul.addr %s242, 32
      %s246 = sadd.s32 %s244, %s245
      %s247 = smul.addr %s246, 8
      %s248 = scalar_lea.vmem %s0, %s247
      %p249 = pneg %p57
      %p250 = pneg %p54
      %p251 = scmp.lt.s32.totalorder %s20, 1
      %s252 = scalar_select %p251, %s20, 1
      %p253 = scmp.lt.s32.totalorder %s22, 1
      %s254 = scalar_select %p253, %s22, 1
      %s255 = smul.addr %s252, 2
      %s256 = sadd.s32 %s254, %s255
      %s257 = smul.addr %s256, 4
      %s258 = scalar_lea.vmem %s1, %s257
      %p259 = pneg %p85
      %p260 = pneg %p82
      %s261 = smul.u32 16, %s21
      %p262 = scmp.lt.s32.totalorder %s20, 1
      %s263 = scalar_select %p262, %s20, 1
      %p264 = scmp.lt.s32.totalorder %s261, 31
      %s265 = scalar_select %p264, %s261, 31
      %s266 = smul.addr %s263, 32
      %s267 = sadd.s32 %s265, %s266
      %s268 = smul.addr %s267, 8
      %s269 = scalar_lea.vmem %s2, %s268
      %p270 = pneg %p113
      %p271 = pneg %p110
      %p272 = scmp.lt.s32.totalorder %s20, 1
      %s273 = scalar_select %p272, %s20, 1
      %p274 = scmp.lt.s32.totalorder %s22, 1
      %s275 = scalar_select %p274, %s22, 1
      %s276 = smul.addr %s273, 2
      %s277 = sadd.s32 %s275, %s276
      %s278 = scalar_lea.vmem %s3, %s277
      %p279 = pneg %p141
      %p280 = pneg %p138
      %p281 = pneg %p167
      %p282 = pneg %p164
      %p283 = scmp.lt.s32.totalorder %s20, 1
      %s284 = scalar_select %p283, %s20, 1
      %s285 = scalar_lea.vmem %s4, %s284
      %s286 = smul.u32 16, %s21
      %p287 = scmp.lt.s32.totalorder %s20, 1
      %s288 = scalar_select %p287, %s20, 1
      %p289 = scmp.lt.s32.totalorder %s286, 31
      %s290 = scalar_select %p289, %s286, 31
      %s291 = smul.addr %s288, 32
      %s292 = sadd.s32 %s290, %s291
      %s293 = smul.addr %s292, 8
      %s294 = scalar_lea.vmem %s0, %s293
      %s295 = smul.u32 16, %s21
      %p296 = scmp.lt.s32.totalorder %s20, 1
      %s297 = scalar_select %p296, %s20, 1
      %p298 = scmp.lt.s32.totalorder %s22, 1
      %s299 = scalar_select %p298, %s22, 1
      %s300 = smul.addr %s297, 2
      %s301 = sadd.s32 %s299, %s300
      %s302 = smul.addr %s301, 4
      %s303 = scalar_lea.vmem %s1, %s302
      %s304 = smul.u32 16, %s21
      %p305 = scmp.lt.s32.totalorder %s20, 1
      %s306 = scalar_select %p305, %s20, 1
      %p307 = scmp.lt.s32.totalorder %s304, 31
      %s308 = scalar_select %p307, %s304, 31
      %s309 = smul.addr %s306, 32
      %s310 = sadd.s32 %s308, %s309
      %s311 = smul.addr %s310, 8
      %s312 = scalar_lea.vmem %s2, %s311
      %s313 = smul.u32 16, %s21
      %p314 = scmp.lt.s32.totalorder %s20, 1
      %s315 = scalar_select %p314, %s20, 1
      %p316 = scmp.lt.s32.totalorder %s22, 1
      %s317 = scalar_select %p316, %s22, 1
      %s318 = smul.addr %s315, 2
      %s319 = sadd.s32 %s317, %s318
      %s320 = scalar_lea.vmem %s3, %s319
      %p321 = scmp.lt.s32.totalorder %s20, 1
      %s322 = scalar_select %p321, %s20, 1
      %s323 = scalar_lea.vmem %s4, %s322
      %p324 = scmp.eq.s32.totalorder %s21, 0
      %p325 = scmp.eq.s32.totalorder %s22, 0
      %p326 = pnand %p324, %p325
      %p327 = pneg %p326
      // Predicated region
      $region37: #{chamfer_loss.1} parent=35 // pred_check
        _
      $region38: #{chamfer_loss.1} parent=35 // pred_check_branch
        %329 = sbr.rel (%p326) target = $region40
      $region39: #{chamfer_loss.1} parent=35 // pred_region
        %vm330 = vcmask 0
        %331 = vst.msk [vmem:[#allocation4] sm:$0x1] %vm330, 0.0
      $region40: #{chamfer_loss.1} parent=35 // pred_fallthru
        _
      %v332 = vld [vmem:[%s294] sm:$0xff]
      %v333 = vld [vmem:[%s294 + $0x8] sm:$0xff]
      %v334 = vld [vmem:[%s294 + $0x10] sm:$0xff]
      %v335 = vld [vmem:[%s294 + $0x18] sm:$0xff]
      %v336 = vld [vmem:[%s294 + $0x20] sm:$0xff]
      %v337 = vld [vmem:[%s294 + $0x28] sm:$0xff]
      %v338 = vld [vmem:[%s294 + $0x30] sm:$0xff]
      %v339 = vld [vmem:[%s294 + $0x38] sm:$0xff]
      %v340 = vld [vmem:[%s294 + $0x40] sm:$0xff]
      %v341 = vld [vmem:[%s294 + $0x48] sm:$0xff]
      %v342 = vld [vmem:[%s294 + $0x50] sm:$0xff]
      %v343 = vld [vmem:[%s294 + $0x58] sm:$0xff]
      %v344 = vld [vmem:[%s294 + $0x60] sm:$0xff]
      %v345 = vld [vmem:[%s294 + $0x68] sm:$0xff]
      %v346 = vld [vmem:[%s294 + $0x70] sm:$0xff]
      %v347 = vld [vmem:[%s294 + $0x78] sm:$0xff]
      %v348 = vld [vmem:[%s303] sm:$0x7]
      %v349 = vld [vmem:[%s312] sm:$0xff]
      %v350 = vld [vmem:[%s312 + $0x8] sm:$0xff]
      %v351 = vld [vmem:[%s312 + $0x10] sm:$0xff]
      %v352 = vld [vmem:[%s312 + $0x18] sm:$0xff]
      %v353 = vld [vmem:[%s312 + $0x20] sm:$0xff]
      %v354 = vld [vmem:[%s312 + $0x28] sm:$0xff]
      %v355 = vld [vmem:[%s312 + $0x30] sm:$0xff]
      %v356 = vld [vmem:[%s312 + $0x38] sm:$0xff]
      %v357 = vld [vmem:[%s312 + $0x40] sm:$0xff]
      %v358 = vld [vmem:[%s312 + $0x48] sm:$0xff]
      %v359 = vld [vmem:[%s312 + $0x50] sm:$0xff]
      %v360 = vld [vmem:[%s312 + $0x58] sm:$0xff]
      %v361 = vld [vmem:[%s312 + $0x60] sm:$0xff]
      %v362 = vld [vmem:[%s312 + $0x68] sm:$0xff]
      %v363 = vld [vmem:[%s312 + $0x70] sm:$0xff]
      %v364 = vld [vmem:[%s312 + $0x78] sm:$0xff]
      %v365 = vld [vmem:[%s320] sm:$0x1]
      %367 = vset.pattern.permute.xlu0 0
      %368 = vperm.xlu0 %367, %v332
      %v369 = vpop.permute.xlu0 %368
      %372 = vset.pattern.permute.xlu0 0
      %373 = vperm.xlu0 %372, %v333
      %v374 = vpop.permute.xlu0 %373
      %377 = vset.pattern.permute.xlu0 0
      %378 = vperm.xlu0 %377, %v334
      %v379 = vpop.permute.xlu0 %378
      %382 = vset.pattern.permute.xlu0 0
      %383 = vperm.xlu0 %382, %v335
      %v384 = vpop.permute.xlu0 %383
      %387 = vset.pattern.permute.xlu0 0
      %388 = vperm.xlu0 %387, %v336
      %v389 = vpop.permute.xlu0 %388
      %392 = vset.pattern.permute.xlu0 0
      %393 = vperm.xlu0 %392, %v337
      %v394 = vpop.permute.xlu0 %393
      %397 = vset.pattern.permute.xlu0 0
      %398 = vperm.xlu0 %397, %v338
      %v399 = vpop.permute.xlu0 %398
      %402 = vset.pattern.permute.xlu0 0
      %403 = vperm.xlu0 %402, %v339
      %v404 = vpop.permute.xlu0 %403
      %407 = vset.pattern.permute.xlu0 0
      %408 = vperm.xlu0 %407, %v340
      %v409 = vpop.permute.xlu0 %408
      %412 = vset.pattern.permute.xlu0 0
      %413 = vperm.xlu0 %412, %v341
      %v414 = vpop.permute.xlu0 %413
      %417 = vset.pattern.permute.xlu0 0
      %418 = vperm.xlu0 %417, %v342
      %v419 = vpop.permute.xlu0 %418
      %422 = vset.pattern.permute.xlu0 0
      %423 = vperm.xlu0 %422, %v343
      %v424 = vpop.permute.xlu0 %423
      %427 = vset.pattern.permute.xlu0 0
      %428 = vperm.xlu0 %427, %v344
      %v429 = vpop.permute.xlu0 %428
      %432 = vset.pattern.permute.xlu0 0
      %433 = vperm.xlu0 %432, %v345
      %v434 = vpop.permute.xlu0 %433
      %437 = vset.pattern.permute.xlu0 0
      %438 = vperm.xlu0 %437, %v346
      %v439 = vpop.permute.xlu0 %438
      %442 = vset.pattern.permute.xlu0 0
      %443 = vperm.xlu0 %442, %v347
      %v444 = vpop.permute.xlu0 %443
      %v446 = vperm.slane %v348, 0
      %v447 = vmul.f32 %v369, %v446
      %v448 = vmul.f32 %v374, %v446
      %v449 = vmul.f32 %v379, %v446
      %v450 = vmul.f32 %v384, %v446
      %v451 = vmul.f32 %v389, %v446
      %v452 = vmul.f32 %v394, %v446
      %v453 = vmul.f32 %v399, %v446
      %v454 = vmul.f32 %v404, %v446
      %v455 = vmul.f32 %v409, %v446
      %v456 = vmul.f32 %v414, %v446
      %v457 = vmul.f32 %v419, %v446
      %v458 = vmul.f32 %v424, %v446
      %v459 = vmul.f32 %v429, %v446
      %v460 = vmul.f32 %v434, %v446
      %v461 = vmul.f32 %v439, %v446
      %v462 = vmul.f32 %v444, %v446
      %463 = vset.pattern.permute.xlu0 1
      %464 = vperm.xlu0 %463, %v332
      %v465 = vpop.permute.xlu0 %464
      %467 = vset.pattern.permute.xlu0 1
      %468 = vperm.xlu0 %467, %v333
      %v469 = vpop.permute.xlu0 %468
      %471 = vset.pattern.permute.xlu0 1
      %472 = vperm.xlu0 %471, %v334
      %v473 = vpop.permute.xlu0 %472
      %475 = vset.pattern.permute.xlu0 1
      %476 = vperm.xlu0 %475, %v335
      %v477 = vpop.permute.xlu0 %476
      %479 = vset.pattern.permute.xlu0 1
      %480 = vperm.xlu0 %479, %v336
      %v481 = vpop.permute.xlu0 %480
      %483 = vset.pattern.permute.xlu0 1
      %484 = vperm.xlu0 %483, %v337
      %v485 = vpop.permute.xlu0 %484
      %487 = vset.pattern.permute.xlu0 1
      %488 = vperm.xlu0 %487, %v338
      %v489 = vpop.permute.xlu0 %488
      %491 = vset.pattern.permute.xlu0 1
      %492 = vperm.xlu0 %491, %v339
      %v493 = vpop.permute.xlu0 %492
      %495 = vset.pattern.permute.xlu0 1
      %496 = vperm.xlu0 %495, %v340
      %v497 = vpop.permute.xlu0 %496
      %499 = vset.pattern.permute.xlu0 1
      %500 = vperm.xlu0 %499, %v341
      %v501 = vpop.permute.xlu0 %500
      %503 = vset.pattern.permute.xlu0 1
      %504 = vperm.xlu0 %503, %v342
      %v505 = vpop.permute.xlu0 %504
      %507 = vset.pattern.permute.xlu0 1
      %508 = vperm.xlu0 %507, %v343
      %v509 = vpop.permute.xlu0 %508
      %511 = vset.pattern.permute.xlu0 1
      %512 = vperm.xlu0 %511, %v344
      %v513 = vpop.permute.xlu0 %512
      %515 = vset.pattern.permute.xlu0 1
      %516 = vperm.xlu0 %515, %v345
      %v517 = vpop.permute.xlu0 %516
      %519 = vset.pattern.permute.xlu0 1
      %520 = vperm.xlu0 %519, %v346
      %v521 = vpop.permute.xlu0 %520
      %523 = vset.pattern.permute.xlu0 1
      %524 = vperm.xlu0 %523, %v347
      %v525 = vpop.permute.xlu0 %524
      %v527 = vperm.slane %v348, 1
      %v528 = vmul.f32 %v465, %v527
      %v529 = vmul.f32 %v469, %v527
      %v530 = vmul.f32 %v473, %v527
      %v531 = vmul.f32 %v477, %v527
      %v532 = vmul.f32 %v481, %v527
      %v533 = vmul.f32 %v485, %v527
      %v534 = vmul.f32 %v489, %v527
      %v535 = vmul.f32 %v493, %v527
      %v536 = vmul.f32 %v497, %v527
      %v537 = vmul.f32 %v501, %v527
      %v538 = vmul.f32 %v505, %v527
      %v539 = vmul.f32 %v509, %v527
      %v540 = vmul.f32 %v513, %v527
      %v541 = vmul.f32 %v517, %v527
      %v542 = vmul.f32 %v521, %v527
      %v543 = vmul.f32 %v525, %v527
      %v544 = vadd.f32 %v447, %v528
      %v545 = vadd.f32 %v448, %v529
      %v546 = vadd.f32 %v449, %v530
      %v547 = vadd.f32 %v450, %v531
      %v548 = vadd.f32 %v451, %v532
      %v549 = vadd.f32 %v452, %v533
      %v550 = vadd.f32 %v453, %v534
      %v551 = vadd.f32 %v454, %v535
      %v552 = vadd.f32 %v455, %v536
      %v553 = vadd.f32 %v456, %v537
      %v554 = vadd.f32 %v457, %v538
      %v555 = vadd.f32 %v458, %v539
      %v556 = vadd.f32 %v459, %v540
      %v557 = vadd.f32 %v460, %v541
      %v558 = vadd.f32 %v461, %v542
      %v559 = vadd.f32 %v462, %v543
      %560 = vset.pattern.permute.xlu0 2
      %561 = vperm.xlu0 %560, %v332
      %v562 = vpop.permute.xlu0 %561
      %564 = vset.pattern.permute.xlu0 2
      %565 = vperm.xlu0 %564, %v333
      %v566 = vpop.permute.xlu0 %565
      %568 = vset.pattern.permute.xlu0 2
      %569 = vperm.xlu0 %568, %v334
      %v570 = vpop.permute.xlu0 %569
      %572 = vset.pattern.permute.xlu0 2
      %573 = vperm.xlu0 %572, %v335
      %v574 = vpop.permute.xlu0 %573
      %576 = vset.pattern.permute.xlu0 2
      %577 = vperm.xlu0 %576, %v336
      %v578 = vpop.permute.xlu0 %577
      %580 = vset.pattern.permute.xlu0 2
      %581 = vperm.xlu0 %580, %v337
      %v582 = vpop.permute.xlu0 %581
      %584 = vset.pattern.permute.xlu0 2
      %585 = vperm.xlu0 %584, %v338
      %v586 = vpop.permute.xlu0 %585
      %588 = vset.pattern.permute.xlu0 2
      %589 = vperm.xlu0 %588, %v339
      %v590 = vpop.permute.xlu0 %589
      %592 = vset.pattern.permute.xlu0 2
      %593 = vperm.xlu0 %592, %v340
      %v594 = vpop.permute.xlu0 %593
      %596 = vset.pattern.permute.xlu0 2
      %597 = vperm.xlu0 %596, %v341
      %v598 = vpop.permute.xlu0 %597
      %600 = vset.pattern.permute.xlu0 2
      %601 = vperm.xlu0 %600, %v342
      %v602 = vpop.permute.xlu0 %601
      %604 = vset.pattern.permute.xlu0 2
      %605 = vperm.xlu0 %604, %v343
      %v606 = vpop.permute.xlu0 %605
      %608 = vset.pattern.permute.xlu0 2
      %609 = vperm.xlu0 %608, %v344
      %v610 = vpop.permute.xlu0 %609
      %612 = vset.pattern.permute.xlu0 2
      %613 = vperm.xlu0 %612, %v345
      %v614 = vpop.permute.xlu0 %613
      %616 = vset.pattern.permute.xlu0 2
      %617 = vperm.xlu0 %616, %v346
      %v618 = vpop.permute.xlu0 %617
      %620 = vset.pattern.permute.xlu0 2
      %621 = vperm.xlu0 %620, %v347
      %v622 = vpop.permute.xlu0 %621
      %v624 = vperm.slane %v348, 2
      %v625 = vmul.f32 %v562, %v624
      %v626 = vmul.f32 %v566, %v624
      %v627 = vmul.f32 %v570, %v624
      %v628 = vmul.f32 %v574, %v624
      %v629 = vmul.f32 %v578, %v624
      %v630 = vmul.f32 %v582, %v624
      %v631 = vmul.f32 %v586, %v624
      %v632 = vmul.f32 %v590, %v624
      %v633 = vmul.f32 %v594, %v624
      %v634 = vmul.f32 %v598, %v624
      %v635 = vmul.f32 %v602, %v624
      %v636 = vmul.f32 %v606, %v624
      %v637 = vmul.f32 %v610, %v624
      %v638 = vmul.f32 %v614, %v624
      %v639 = vmul.f32 %v618, %v624
      %v640 = vmul.f32 %v622, %v624
      %v641 = vadd.f32 %v544, %v625
      %v642 = vadd.f32 %v545, %v626
      %v643 = vadd.f32 %v546, %v627
      %v644 = vadd.f32 %v547, %v628
      %v645 = vadd.f32 %v548, %v629
      %v646 = vadd.f32 %v549, %v630
      %v647 = vadd.f32 %v550, %v631
      %v648 = vadd.f32 %v551, %v632
      %v649 = vadd.f32 %v552, %v633
      %v650 = vadd.f32 %v553, %v634
      %v651 = vadd.f32 %v554, %v635
      %v652 = vadd.f32 %v555, %v636
      %v653 = vadd.f32 %v556, %v637
      %v654 = vadd.f32 %v557, %v638
      %v655 = vadd.f32 %v558, %v639
      %v656 = vadd.f32 %v559, %v640
      %658 = vset.pattern.permute.xlu0 0
      %659 = vperm.xlu0 %658, %v349
      %v660 = vpop.permute.xlu0 %659
      %663 = vset.pattern.permute.xlu0 0
      %664 = vperm.xlu0 %663, %v350
      %v665 = vpop.permute.xlu0 %664
      %668 = vset.pattern.permute.xlu0 0
      %669 = vperm.xlu0 %668, %v351
      %v670 = vpop.permute.xlu0 %669
      %673 = vset.pattern.permute.xlu0 0
      %674 = vperm.xlu0 %673, %v352
      %v675 = vpop.permute.xlu0 %674
      %678 = vset.pattern.permute.xlu0 0
      %679 = vperm.xlu0 %678, %v353
      %v680 = vpop.permute.xlu0 %679
      %683 = vset.pattern.permute.xlu0 0
      %684 = vperm.xlu0 %683, %v354
      %v685 = vpop.permute.xlu0 %684
      %688 = vset.pattern.permute.xlu0 0
      %689 = vperm.xlu0 %688, %v355
      %v690 = vpop.permute.xlu0 %689
      %693 = vset.pattern.permute.xlu0 0
      %694 = vperm.xlu0 %693, %v356
      %v695 = vpop.permute.xlu0 %694
      %698 = vset.pattern.permute.xlu0 0
      %699 = vperm.xlu0 %698, %v357
      %v700 = vpop.permute.xlu0 %699
      %703 = vset.pattern.permute.xlu0 0
      %704 = vperm.xlu0 %703, %v358
      %v705 = vpop.permute.xlu0 %704
      %708 = vset.pattern.permute.xlu0 0
      %709 = vperm.xlu0 %708, %v359
      %v710 = vpop.permute.xlu0 %709
      %713 = vset.pattern.permute.xlu0 0
      %714 = vperm.xlu0 %713, %v360
      %v715 = vpop.permute.xlu0 %714
      %718 = vset.pattern.permute.xlu0 0
      %719 = vperm.xlu0 %718, %v361
      %v720 = vpop.permute.xlu0 %719
      %723 = vset.pattern.permute.xlu0 0
      %724 = vperm.xlu0 %723, %v362
      %v725 = vpop.permute.xlu0 %724
      %728 = vset.pattern.permute.xlu0 0
      %729 = vperm.xlu0 %728, %v363
      %v730 = vpop.permute.xlu0 %729
      %733 = vset.pattern.permute.xlu0 0
      %734 = vperm.xlu0 %733, %v364
      %v735 = vpop.permute.xlu0 %734
      %v738 = vperm.slane %v365, 0
      %v740 = vadd.f32 %v660, %v738
      %v741 = vadd.f32 %v665, %v738
      %v742 = vadd.f32 %v670, %v738
      %v743 = vadd.f32 %v675, %v738
      %v744 = vadd.f32 %v680, %v738
      %v745 = vadd.f32 %v685, %v738
      %v746 = vadd.f32 %v690, %v738
      %v747 = vadd.f32 %v695, %v738
      %v748 = vadd.f32 %v700, %v738
      %v749 = vadd.f32 %v705, %v738
      %v750 = vadd.f32 %v710, %v738
      %v751 = vadd.f32 %v715, %v738
      %v752 = vadd.f32 %v720, %v738
      %v753 = vadd.f32 %v725, %v738
      %v754 = vadd.f32 %v730, %v738
      %v755 = vadd.f32 %v735, %v738
      %v756 = vmul.f32 %v641, 2.0
      %v757 = vmul.f32 %v642, 2.0
      %v758 = vmul.f32 %v643, 2.0
      %v759 = vmul.f32 %v644, 2.0
      %v760 = vmul.f32 %v645, 2.0
      %v761 = vmul.f32 %v646, 2.0
      %v762 = vmul.f32 %v647, 2.0
      %v763 = vmul.f32 %v648, 2.0
      %v764 = vmul.f32 %v649, 2.0
      %v765 = vmul.f32 %v650, 2.0
      %v766 = vmul.f32 %v651, 2.0
      %v767 = vmul.f32 %v652, 2.0
      %v768 = vmul.f32 %v653, 2.0
      %v769 = vmul.f32 %v654, 2.0
      %v770 = vmul.f32 %v655, 2.0
      %v771 = vmul.f32 %v656, 2.0
      %v772 = vsub.f32 %v740, %v756
      %v773 = vsub.f32 %v741, %v757
      %v774 = vsub.f32 %v742, %v758
      %v775 = vsub.f32 %v743, %v759
      %v776 = vsub.f32 %v744, %v760
      %v777 = vsub.f32 %v745, %v761
      %v778 = vsub.f32 %v746, %v762
      %v779 = vsub.f32 %v747, %v763
      %v780 = vsub.f32 %v748, %v764
      %v781 = vsub.f32 %v749, %v765
      %v782 = vsub.f32 %v750, %v766
      %v783 = vsub.f32 %v751, %v767
      %v784 = vsub.f32 %v752, %v768
      %v785 = vsub.f32 %v753, %v769
      %v786 = vsub.f32 %v754, %v770
      %v787 = vsub.f32 %v755, %v771
      %788 = vmin.xlane.f32.xlu0 %v772
      %v789 = vpop.xlane.xlu0 %788
      %790 = vmin.xlane.f32.xlu0 %v773
      %v791 = vpop.xlane.xlu0 %790
      %792 = vmin.xlane.f32.xlu0 %v774
      %v793 = vpop.xlane.xlu0 %792
      %794 = vmin.xlane.f32.xlu0 %v775
      %v795 = vpop.xlane.xlu0 %794
      %796 = vmin.xlane.f32.xlu0 %v776
      %v797 = vpop.xlane.xlu0 %796
      %798 = vmin.xlane.f32.xlu0 %v777
      %v799 = vpop.xlane.xlu0 %798
      %800 = vmin.xlane.f32.xlu0 %v778
      %v801 = vpop.xlane.xlu0 %800
      %802 = vmin.xlane.f32.xlu0 %v779
      %v803 = vpop.xlane.xlu0 %802
      %804 = vmin.xlane.f32.xlu0 %v780
      %v805 = vpop.xlane.xlu0 %804
      %806 = vmin.xlane.f32.xlu0 %v781
      %v807 = vpop.xlane.xlu0 %806
      %808 = vmin.xlane.f32.xlu0 %v782
      %v809 = vpop.xlane.xlu0 %808
      %810 = vmin.xlane.f32.xlu0 %v783
      %v811 = vpop.xlane.xlu0 %810
      %812 = vmin.xlane.f32.xlu0 %v784
      %v813 = vpop.xlane.xlu0 %812
      %814 = vmin.xlane.f32.xlu0 %v785
      %v815 = vpop.xlane.xlu0 %814
      %816 = vmin.xlane.f32.xlu0 %v786
      %v817 = vpop.xlane.xlu0 %816
      %818 = vmin.xlane.f32.xlu0 %v787
      %v819 = vpop.xlane.xlu0 %818
      %v820 = vmin.f32 %v772, %v776
      %v821 = vmin.f32 %v773, %v777
      %v822 = vmin.f32 %v774, %v778
      %v823 = vmin.f32 %v775, %v779
      %v824 = vmin.f32 %v820, %v780
      %v825 = vmin.f32 %v821, %v781
      %v826 = vmin.f32 %v822, %v782
      %v827 = vmin.f32 %v823, %v783
      %v828 = vmin.f32 %v824, %v784
      %v829 = vmin.f32 %v825, %v785
      %v830 = vmin.f32 %v826, %v786
      %v831 = vmin.f32 %v827, %v787
      %v832 = vmin.f32 %v828, %v829
      %v833 = vmin.f32 %v830, %v831
      %v834 = vmin.f32 %v832, %v833
      %v835 = vrot.slane %v834, 4
      %v836 = vmin.f32 %v834, %v835
      %v837 = vrot.slane %v836, 2
      %v838 = vmin.f32 %v836, %v837
      %v839 = vrot.slane %v838, 1
      %v840 = vmin.f32 %v838, %v839
      // Predicated region
      $region41: #{chamfer_loss.1} parent=35 // pred_check
        %p841 = pneg %p325
      $region42: #{chamfer_loss.1} parent=35 // pred_check_branch
        %843 = sbr.rel (%p841) target = $region44
      $region43: #{chamfer_loss.1} parent=35 // pred_region
        %vm844 = vcmask 7168
        %845 = vst.msk [vmem:[#allocation2] sm:$0xff] %vm844, %v789
        %846 = vst.msk [vmem:[#allocation2 + $0x8] sm:$0xff] %vm844, %v791
        %847 = vst.msk [vmem:[#allocation2 + $0x10] sm:$0xff] %vm844, %v793
        %848 = vst.msk [vmem:[#allocation2 + $0x18] sm:$0xff] %vm844, %v795
        %849 = vst.msk [vmem:[#allocation2 + $0x20] sm:$0xff] %vm844, %v797
        %850 = vst.msk [vmem:[#allocation2 + $0x28] sm:$0xff] %vm844, %v799
        %851 = vst.msk [vmem:[#allocation2 + $0x30] sm:$0xff] %vm844, %v801
        %852 = vst.msk [vmem:[#allocation2 + $0x38] sm:$0xff] %vm844, %v803
        %853 = vst.msk [vmem:[#allocation2 + $0x40] sm:$0xff] %vm844, %v805
        %854 = vst.msk [vmem:[#allocation2 + $0x48] sm:$0xff] %vm844, %v807
        %855 = vst.msk [vmem:[#allocation2 + $0x50] sm:$0xff] %vm844, %v809
        %856 = vst.msk [vmem:[#allocation2 + $0x58] sm:$0xff] %vm844, %v811
        %857 = vst.msk [vmem:[#allocation2 + $0x60] sm:$0xff] %vm844, %v813
        %858 = vst.msk [vmem:[#allocation2 + $0x68] sm:$0xff] %vm844, %v815
        %859 = vst.msk [vmem:[#allocation2 + $0x70] sm:$0xff] %vm844, %v817
        %860 = vst.msk [vmem:[#allocation2 + $0x78] sm:$0xff] %vm844, %v819
      $region44: #{chamfer_loss.1} parent=35 // pred_fallthru
        _
      %p861 = scmp.ne.s32.totalorder %s22, 0
      // Predicated region
      $region45: #{chamfer_loss.1} parent=35 // pred_check
        %p862 = pneg %p861
      $region46: #{chamfer_loss.1} parent=35 // pred_check_branch
        %864 = sbr.rel (%p862) target = $region48
      $region47: #{chamfer_loss.1} parent=35 // pred_region
        %v865 = vld [vmem:[#allocation2] sm:$0xff]
        %v866 = vld [vmem:[#allocation2 + $0x8] sm:$0xff]
        %v867 = vld [vmem:[#allocation2 + $0x10] sm:$0xff]
        %v868 = vld [vmem:[#allocation2 + $0x18] sm:$0xff]
        %v869 = vld [vmem:[#allocation2 + $0x20] sm:$0xff]
        %v870 = vld [vmem:[#allocation2 + $0x28] sm:$0xff]
        %v871 = vld [vmem:[#allocation2 + $0x30] sm:$0xff]
        %v872 = vld [vmem:[#allocation2 + $0x38] sm:$0xff]
        %v873 = vld [vmem:[#allocation2 + $0x40] sm:$0xff]
        %v874 = vld [vmem:[#allocation2 + $0x48] sm:$0xff]
        %v875 = vld [vmem:[#allocation2 + $0x50] sm:$0xff]
        %v876 = vld [vmem:[#allocation2 + $0x58] sm:$0xff]
        %v877 = vld [vmem:[#allocation2 + $0x60] sm:$0xff]
        %v878 = vld [vmem:[#allocation2 + $0x68] sm:$0xff]
        %v879 = vld [vmem:[#allocation2 + $0x70] sm:$0xff]
        %v880 = vld [vmem:[#allocation2 + $0x78] sm:$0xff]
        %v881 = vmin.f32 %v865, %v789
        %v882 = vmin.f32 %v866, %v791
        %v883 = vmin.f32 %v867, %v793
        %v884 = vmin.f32 %v868, %v795
        %v885 = vmin.f32 %v869, %v797
        %v886 = vmin.f32 %v870, %v799
        %v887 = vmin.f32 %v871, %v801
        %v888 = vmin.f32 %v872, %v803
        %v889 = vmin.f32 %v873, %v805
        %v890 = vmin.f32 %v874, %v807
        %v891 = vmin.f32 %v875, %v809
        %v892 = vmin.f32 %v876, %v811
        %v893 = vmin.f32 %v877, %v813
        %v894 = vmin.f32 %v878, %v815
        %v895 = vmin.f32 %v879, %v817
        %v896 = vmin.f32 %v880, %v819
        %vm897 = vcmask 7168
        %898 = vst.msk [vmem:[#allocation2] sm:$0xff] %vm897, %v881
        %899 = vst.msk [vmem:[#allocation2 + $0x8] sm:$0xff] %vm897, %v882
        %900 = vst.msk [vmem:[#allocation2 + $0x10] sm:$0xff] %vm897, %v883
        %901 = vst.msk [vmem:[#allocation2 + $0x18] sm:$0xff] %vm897, %v884
        %902 = vst.msk [vmem:[#allocation2 + $0x20] sm:$0xff] %vm897, %v885
        %903 = vst.msk [vmem:[#allocation2 + $0x28] sm:$0xff] %vm897, %v886
        %904 = vst.msk [vmem:[#allocation2 + $0x30] sm:$0xff] %vm897, %v887
        %905 = vst.msk [vmem:[#allocation2 + $0x38] sm:$0xff] %vm897, %v888
        %906 = vst.msk [vmem:[#allocation2 + $0x40] sm:$0xff] %vm897, %v889
        %907 = vst.msk [vmem:[#allocation2 + $0x48] sm:$0xff] %vm897, %v890
        %908 = vst.msk [vmem:[#allocation2 + $0x50] sm:$0xff] %vm897, %v891
        %909 = vst.msk [vmem:[#allocation2 + $0x58] sm:$0xff] %vm897, %v892
        %910 = vst.msk [vmem:[#allocation2 + $0x60] sm:$0xff] %vm897, %v893
        %911 = vst.msk [vmem:[#allocation2 + $0x68] sm:$0xff] %vm897, %v894
        %912 = vst.msk [vmem:[#allocation2 + $0x70] sm:$0xff] %vm897, %v895
        %913 = vst.msk [vmem:[#allocation2 + $0x78] sm:$0xff] %vm897, %v896
      $region48: #{chamfer_loss.1} parent=35 // pred_fallthru
        _
      // Predicated region
      $region49: #{chamfer_loss.1} parent=35 // pred_check
        %p914 = pneg %p324
      $region50: #{chamfer_loss.1} parent=35 // pred_check_branch
        %916 = sbr.rel (%p914) target = $region52
      $region51: #{chamfer_loss.1} parent=35 // pred_region
        %s917 = scalar_lea.vmem [#allocation3], %s22
        %918 = vst [vmem:[%s917] sm:$0x1] %v840
      $region52: #{chamfer_loss.1} parent=35 // pred_fallthru
        _
      %p919 = scmp.ne.s32.totalorder %s21, 0
      // Predicated region
      $region53: #{chamfer_loss.1} parent=35 // pred_check
        %p920 = pneg %p919
      $region54: #{chamfer_loss.1} parent=35 // pred_check_branch
        %922 = sbr.rel (%p920) target = $region56
      $region55: #{chamfer_loss.1} parent=35 // pred_region
        %s923 = scalar_lea.vmem [#allocation3], %s22
        %v924 = vld [vmem:[%s923] sm:$0x1]
        %v925 = vmin.f32 %v924, %v840
        %926 = vst [vmem:[%s923] sm:$0x1] %v925
      $region56: #{chamfer_loss.1} parent=35 // pred_fallthru
        _
      %p927 = scmp.eq.s32.totalorder %s22, 1
      // Predicated region
      $region57: #{chamfer_loss.1} parent=35 // pred_check
        %p928 = pneg %p927
      $region58: #{chamfer_loss.1} parent=35 // pred_check_branch
        %930 = sbr.rel (%p928) target = $region60
      $region59: #{chamfer_loss.1} parent=35 // pred_region
        %s931 = smul.u32 %s21, 128
        %v932 = vlaneseq
        %v933 = vshrl.u32 %v932, 7
        %v934 = vadd.s32 %v933, 8
        %v935 = vadd.s32 %v933, 16
        %v936 = vadd.s32 %v933, 24
        %v937 = vadd.s32 %v933, 32
        %v938 = vadd.s32 %v933, 40
        %v939 = vadd.s32 %v933, 48
        %v940 = vadd.s32 %v933, 56
        %v941 = vadd.s32 %v933, 64
        %v942 = vadd.s32 %v933, 72
        %v943 = vadd.s32 %v933, 80
        %v944 = vadd.s32 %v933, 88
        %v945 = vadd.s32 %v933, 96
        %v946 = vadd.s32 %v933, 104
        %v947 = vadd.s32 %v933, 112
        %v948 = vadd.s32 %v933, 120
        %v949 = vstv %s931
        %v950 = vadd.s32 %v949, %v933
        %v951 = vadd.s32 %v949, %v934
        %v952 = vadd.s32 %v949, %v935
        %v953 = vadd.s32 %v949, %v936
        %v954 = vadd.s32 %v949, %v937
        %v955 = vadd.s32 %v949, %v938
        %v956 = vadd.s32 %v949, %v939
        %v957 = vadd.s32 %v949, %v940
        %v958 = vadd.s32 %v949, %v941
        %v959 = vadd.s32 %v949, %v942
        %v960 = vadd.s32 %v949, %v943
        %v961 = vadd.s32 %v949, %v944
        %v962 = vadd.s32 %v949, %v945
        %v963 = vadd.s32 %v949, %v946
        %v964 = vadd.s32 %v949, %v947
        %v965 = vadd.s32 %v949, %v948
        %vm966 = vcmp.lt.s32.totalorder %v950, 200
        %vm967 = vcmp.lt.s32.totalorder %v951, 200
        %vm968 = vcmp.lt.s32.totalorder %v952, 200
        %vm969 = vcmp.lt.s32.totalorder %v953, 200
        %vm970 = vcmp.lt.s32.totalorder %v954, 200
        %vm971 = vcmp.lt.s32.totalorder %v955, 200
        %vm972 = vcmp.lt.s32.totalorder %v956, 200
        %vm973 = vcmp.lt.s32.totalorder %v957, 200
        %vm974 = vcmp.lt.s32.totalorder %v958, 200
        %vm975 = vcmp.lt.s32.totalorder %v959, 200
        %vm976 = vcmp.lt.s32.totalorder %v960, 200
        %vm977 = vcmp.lt.s32.totalorder %v961, 200
        %vm978 = vcmp.lt.s32.totalorder %v962, 200
        %vm979 = vcmp.lt.s32.totalorder %v963, 200
        %vm980 = vcmp.lt.s32.totalorder %v964, 200
        %vm981 = vcmp.lt.s32.totalorder %v965, 200
        %v982 = vld [vmem:[#allocation2] sm:$0xff]
        %v983 = vld [vmem:[#allocation2 + $0x8] sm:$0xff]
        %v984 = vld [vmem:[#allocation2 + $0x10] sm:$0xff]
        %v985 = vld [vmem:[#allocation2 + $0x18] sm:$0xff]
        %v986 = vld [vmem:[#allocation2 + $0x20] sm:$0xff]
        %v987 = vld [vmem:[#allocation2 + $0x28] sm:$0xff]
        %v988 = vld [vmem:[#allocation2 + $0x30] sm:$0xff]
        %v989 = vld [vmem:[#allocation2 + $0x38] sm:$0xff]
        %v990 = vld [vmem:[#allocation2 + $0x40] sm:$0xff]
        %v991 = vld [vmem:[#allocation2 + $0x48] sm:$0xff]
        %v992 = vld [vmem:[#allocation2 + $0x50] sm:$0xff]
        %v993 = vld [vmem:[#allocation2 + $0x58] sm:$0xff]
        %v994 = vld [vmem:[#allocation2 + $0x60] sm:$0xff]
        %v995 = vld [vmem:[#allocation2 + $0x68] sm:$0xff]
        %v996 = vld [vmem:[#allocation2 + $0x70] sm:$0xff]
        %v997 = vld [vmem:[#allocation2 + $0x78] sm:$0xff]
        %v998 = vsel %vm966, %v982, 0.0
        %v999 = vsel %vm967, %v983, 0.0
        %v1000 = vsel %vm968, %v984, 0.0
        %v1001 = vsel %vm969, %v985, 0.0
        %v1002 = vsel %vm970, %v986, 0.0
        %v1003 = vsel %vm971, %v987, 0.0
        %v1004 = vsel %vm972, %v988, 0.0
        %v1005 = vsel %vm973, %v989, 0.0
        %v1006 = vsel %vm974, %v990, 0.0
        %v1007 = vsel %vm975, %v991, 0.0
        %v1008 = vsel %vm976, %v992, 0.0
        %v1009 = vsel %vm977, %v993, 0.0
        %v1010 = vsel %vm978, %v994, 0.0
        %v1011 = vsel %vm979, %v995, 0.0
        %v1012 = vsel %vm980, %v996, 0.0
        %v1013 = vsel %vm981, %v997, 0.0
        %v1014 = vld [vmem:[#allocation4] sm:$0x1]
        %vm1015 = vcmask 7168
        %v1016 = vsel %vm1015, %v998, 0.0
        %v1017 = vsel %vm1015, %v999, 0.0
        %v1018 = vadd.f32 %v1016, %v1017
        %v1019 = vsel %vm1015, %v1000, 0.0
        %v1020 = vadd.f32 %v1018, %v1019
        %v1021 = vsel %vm1015, %v1001, 0.0
        %v1022 = vadd.f32 %v1020, %v1021
        %v1023 = vsel %vm1015, %v1002, 0.0
        %v1024 = vadd.f32 %v1022, %v1023
        %v1025 = vsel %vm1015, %v1003, 0.0
        %v1026 = vadd.f32 %v1024, %v1025
        %v1027 = vsel %vm1015, %v1004, 0.0
        %v1028 = vadd.f32 %v1026, %v1027
        %v1029 = vsel %vm1015, %v1005, 0.0
        %v1030 = vadd.f32 %v1028, %v1029
        %v1031 = vsel %vm1015, %v1006, 0.0
        %v1032 = vadd.f32 %v1030, %v1031
        %v1033 = vsel %vm1015, %v1007, 0.0
        %v1034 = vadd.f32 %v1032, %v1033
        %v1035 = vsel %vm1015, %v1008, 0.0
        %v1036 = vadd.f32 %v1034, %v1035
        %v1037 = vsel %vm1015, %v1009, 0.0
        %v1038 = vadd.f32 %v1036, %v1037
        %v1039 = vsel %vm1015, %v1010, 0.0
        %v1040 = vadd.f32 %v1038, %v1039
        %v1041 = vsel %vm1015, %v1011, 0.0
        %v1042 = vadd.f32 %v1040, %v1041
        %v1043 = vsel %vm1015, %v1012, 0.0
        %v1044 = vadd.f32 %v1042, %v1043
        %v1045 = vsel %vm1015, %v1013, 0.0
        %v1046 = vadd.f32 %v1044, %v1045
        %v1047 = vrot.slane %v1046, 4
        %v1048 = vadd.f32 %v1046, %v1047
        %v1049 = vrot.slane %v1048, 2
        %v1050 = vadd.f32 %v1048, %v1049
        %v1051 = vrot.slane %v1050, 1
        %v1052 = vadd.f32 %v1050, %v1051
        %v1053 = vadd.f32 %v1014, %v1052
        %vm1054 = vcmask 0
        %1055 = vst.msk [vmem:[#allocation4] sm:$0x1] %vm1054, %v1053
      $region60: #{chamfer_loss.1} parent=35 // pred_fallthru
        _
      %p1056 = scmp.eq.s32.totalorder %s21, 1
      // Predicated region
      $region61: #{chamfer_loss.1} parent=35 // pred_check
        %p1057 = pneg %p1056
      $region62: #{chamfer_loss.1} parent=35 // pred_check_branch
        %1059 = sbr.rel (%p1057) target = $region64
      $region63: #{chamfer_loss.1} parent=35 // pred_region
        %s1060 = smul.u32 %s22, 128
        %v1061 = vlaneseq
        %v1062 = vand.u32 %v1061, 127
        %v1063 = vstv %s1060
        %v1064 = vadd.s32 %v1063, %v1062
        %vm1065 = vcmp.lt.s32.totalorder %v1064, 160
        %s1066 = scalar_lea.vmem [#allocation3], %s22
        %v1067 = vld [vmem:[%s1066] sm:$0x1]
        %v1068 = vsel %vm1065, %v1067, 0.0
        %v1069 = vld [vmem:[#allocation4] sm:$0x1]
        %vm1070 = vcmask 1040384
        %v1071 = vsel %vm1070, %v1068, 0.0
        %1072 = vadd.xlane.f32.xlu0 %v1071
        %v1073 = vpop.xlane.xlu0 %1072
        %v1074 = vadd.f32 %v1069, %v1073
        %vm1075 = vcmask 0
        %1076 = vst.msk [vmem:[#allocation4] sm:$0x1] %vm1075, %v1074
      $region64: #{chamfer_loss.1} parent=35 // pred_fallthru
        _
      %p1077 = pnand %p1056, %p927
      %p1078 = pneg %p1077
      // Predicated region
      $region65: #{chamfer_loss.1} parent=35 // pred_check
        _
      $region66: #{chamfer_loss.1} parent=35 // pred_check_branch
        %1080 = sbr.rel (%p1077) target = $region68
      $region67: #{chamfer_loss.1} parent=35 // pred_region
        %v1081 = vld [vmem:[#allocation4] sm:$0x1]
        %vm1082 = vcmask 0
        %1083 = vst.msk [vmem:[%s323] sm:$0x1] %vm1082, %v1081
      $region68: #{chamfer_loss.1} parent=35 // pred_fallthru
        _
      %p1084 = scmp.lt.s32.totalorder %s20, 1
      %s1085 = scalar_select %p1084, %s20, 1
      %s1086 = scalar_lea.vmem %s4, %s1085
      // Predicated region
      $region69: #{chamfer_loss.1} parent=35 // pred_check
        %p1087 = pneg %p164
      $region70: #{chamfer_loss.1} parent=35 // pred_check_branch
        %1089 = sbr.rel (%p1087) target = $region72
      $region71: #{chamfer_loss.1} parent=35 // pred_region
        _
      $region72: #{chamfer_loss.1} parent=35 // pred_fallthru
        _
    $region36: #{chamfer_loss.1} parent=5 // pred_fallthru
      _
    %p1090 = scmp.le.s32.totalorder 2, %s10
    // Predicated region
    $region73: #{chamfer_loss.1} parent=5 // pred_check
      %p1091 = pneg %p1090
    $region74: #{chamfer_loss.1} parent=5 // pred_check_branch
      %1093 = sbr.rel (%p1091) target = $region76
    $region75: #{chamfer_loss.1} parent=5 // pred_region
      %s1094 = ssub.s32 %s10, 2
      // Predicated region
      $region77: #{chamfer_loss.1} parent=75 // pred_check
        %p1095 = pneg %p170
      $region78: #{chamfer_loss.1} parent=75 // pred_check_branch
        %1097 = sbr.rel (%p1095) target = $region80
      $region79: #{chamfer_loss.1} parent=75 // pred_region
        %p1098 = scmp.lt.s32.totalorder %s23, 1
        %s1099 = scalar_select %p1098, %s23, 1
        %s1100 = scalar_lea.vmem %s4, %s1099
      $region80: #{chamfer_loss.1} parent=75 // pred_fallthru
        _
    $region76: #{chamfer_loss.1} parent=5 // pred_fallthru
      _
  $region6: #{chamfer_loss.1} parent=0 // loop_footer
    %s14 = sadd.s32 1, %s10
  $region7: #{chamfer_loss.1} parent=0 // loop_footer_branch
    %9 = sbr.rel target = $region3
  $region8: #{chamfer_loss.1} parent=0 // loop_exit
    _

</llo_original>
